<compile_context>
chip_gen: v7x
topology: tpu7x:2x2x1
jax: 0.10.0
libtpu: 0.0.40
codegen_flags: <defaults>
</compile_context>

<pallas_src>
import functools
import math

import jax
import jax.numpy as jnp
from jax.experimental import pallas as pl
from jax.experimental.pallas import tpu as pltpu

_SQRT_HALF = 1.0 / math.sqrt(2.0)


def _round_up(x, m):
    return ((x + m - 1) // m) * m


def _ffn_kernel(x_ref, g_ref, bt_ref, w1_ref, b1_ref, w2_ref, b2_ref, o_ref, *,
                prenorm_residual, eps):
    # x_ref:  (TM, dim)          g_ref/bt_ref: (1, dim)
    # w1_ref: (dim, hidden)      b1_ref: (1, hidden)
    # w2_ref: (hidden, dim)      b2_ref: (1, dim)       o_ref: (TM, dim)
    x = x_ref[...].astype(jnp.float32)

    if prenorm_residual:
        mu = jnp.mean(x, axis=-1, keepdims=True)
        var = jnp.mean(jnp.square(x - mu), axis=-1, keepdims=True)
        xin = (x - mu) * jax.lax.rsqrt(var + eps)
        xin = xin * g_ref[...].astype(jnp.float32) + bt_ref[...].astype(jnp.float32)
    else:
        xin = x

    # MXU takes native-dtype operands, accumulates in f32.
    h = jnp.dot(xin.astype(w1_ref.dtype), w1_ref[...],
                preferred_element_type=jnp.float32)
    h = h + b1_ref[...].astype(jnp.float32)

    # Exact GELU (PyTorch nn.GELU default): 0.5 * h * (1 + erf(h / sqrt(2))).
    # Dropout(p=0.0) is the identity -- nothing to do.
    h = 0.5 * h * (1.0 + jax.lax.erf(h * _SQRT_HALF))

    y = jnp.dot(h.astype(w2_ref.dtype), w2_ref[...],
                preferred_element_type=jnp.float32)
    y = y + b2_ref[...].astype(jnp.float32)

    if prenorm_residual:
        y = y + x  # residual add in f32

    o_ref[...] = y.astype(o_ref.dtype)


def prepare_ffn_params(w1, b1, w2, b2, gamma=None, beta=None, dtype=None):
    """One-time parameter repack (PyTorch layout -> kernel layout).

    w1: [hidden, dim], b1: [hidden]   (nn.Linear(dim, hidden))
    w2: [dim, hidden], b2: [dim]      (nn.Linear(hidden, dim))
    gamma/beta: [dim]                 (PreNorm LayerNorm affine)
    Called once at init -- NOT on the per-call path.
    """
    dtype = dtype or w1.dtype
    dim = w1.shape[1]
    if gamma is None:
        gamma = jnp.ones((dim,), dtype)
    if beta is None:
        beta = jnp.zeros((dim,), dtype)
    return {
        "w1t": jnp.asarray(w1, dtype).T,                 # (dim, hidden)
        "b1": jnp.asarray(b1, dtype).reshape(1, -1),     # (1, hidden)
        "w2t": jnp.asarray(w2, dtype).T,                 # (hidden, dim)
        "b2": jnp.asarray(b2, dtype).reshape(1, -1),     # (1, dim)
        "gamma": jnp.asarray(gamma, dtype).reshape(1, -1),
        "beta": jnp.asarray(beta, dtype).reshape(1, -1),
    }


def ffn_block_pallas(x, params, *, prenorm_residual=True, eps=1e-5, tm=1024):
    """Transformer FF sub-block: x + FFN(LayerNorm(x)) (or bare FFN if flag False).

    x: [batch, seq, dim]; params from prepare_ffn_params.
    """
    batch, seq, dim = x.shape
    w1t, b1 = params["w1t"], params["b1"]
    w2t, b2 = params["w2t"], params["b2"]
    gamma, beta = params["gamma"], params["beta"]
    hidden = w1t.shape[1]
    assert w1t.shape[0] == dim and w2t.shape == (hidden, dim)

    M = batch * seq
    dtype = x.dtype
    itemsize = jnp.dtype(dtype).itemsize

    # Balanced, sublane-aligned row tiles; >=2 tiles when M allows so the "parallel"
    # grid axis can shard across both TensorCores on v7x.
    sub = 16 if dtype == jnp.bfloat16 else 8
    min_tiles = 2 if M > sub else 1
    n_tiles = max(pl.cdiv(M, tm), min_tiles)
    tm_eff = min(_round_up(pl.cdiv(M, n_tiles), sub), _round_up(M, sub))
    grid_m = pl.cdiv(M, tm_eff)

    # x is fed un-padded: the reshape below is a view, no HBM repack.
    x2d = x.reshape(M, dim)

    # Exact VMEM accounting: double-buffered x/out tiles + (double-buffered) resident
    # weights/biases + f32 intermediates, plus 2 MiB slack. Capped at 32 MiB (v7x-safe).
    io_tiles = 2 * 2 * tm_eff * dim * itemsize
    weights = 2 * (2 * dim * hidden + hidden + 3 * dim) * itemsize
    interm = tm_eff * hidden * 4 + 2 * tm_eff * dim * 4
    vmem_limit = int(min(max(io_tiles + weights + interm + (2 << 20), 4 << 20), 32 << 20))

    cost = pl.CostEstimate(
        flops=2 * M * dim * hidden * 2,
        transcendentals=M * hidden + (M if prenorm_residual else 0),
        bytes_accessed=(2 * M * dim + 2 * dim * hidden + hidden + 3 * dim) * itemsize,
    )

    kernel = functools.partial(_ffn_kernel,
                               prenorm_residual=prenorm_residual, eps=eps)

    out2d = pl.pallas_call(
        kernel,
        out_shape=jax.ShapeDtypeStruct((M, dim), dtype),
        grid_spec=pltpu.PrefetchScalarGridSpec(
            num_scalar_prefetch=0,
            grid=(grid_m,),
            in_specs=[
                pl.BlockSpec((tm_eff, dim), lambda i: (i, 0)),    # x tile (pipelined)
                pl.BlockSpec((1, dim), lambda i: (0, 0)),         # gamma (resident)
                pl.BlockSpec((1, dim), lambda i: (0, 0)),         # beta  (resident)
                pl.BlockSpec((dim, hidden), lambda i: (0, 0)),    # W1^T  (resident)
                pl.BlockSpec((1, hidden), lambda i: (0, 0)),      # b1    (resident)
                pl.BlockSpec((hidden, dim), lambda i: (0, 0)),    # W2^T  (resident)
                pl.BlockSpec((1, dim), lambda i: (0, 0)),         # b2    (resident)
            ],
            out_specs=pl.BlockSpec((tm_eff, dim), lambda i: (i, 0)),
        ),
        compiler_params=pltpu.CompilerParams(
            dimension_semantics=("parallel",),
            vmem_limit_bytes=vmem_limit,
        ),
        cost_estimate=cost,
    )(x2d, gamma, beta, w1t, b1, w2t, b2)

    return out2d.reshape(batch, seq, dim)


# ---------------- Pure-JAX references (PyTorch semantics) ----------------

def ffn_ref(x, w1, b1, w2, b2):
    h = jnp.einsum("bsd,hd->bsh", x, w1) + b1
    h = 0.5 * h * (1.0 + jax.lax.erf(h * _SQRT_HALF))
    return jnp.einsum("bsh,dh->bsd", h, w2) + b2


def ffn_block_ref(x, gamma, beta, w1, b1, w2, b2, eps=1e-5):
    mu = jnp.mean(x, axis=-1, keepdims=True)
    var = jnp.mean(jnp.square(x - mu), axis=-1, keepdims=True)
    xn = (x - mu) * jax.lax.rsqrt(var + eps) * gamma + beta
    return ffn_ref(xn, w1, b1, w2, b2) + x


if __name__ == "__main__":
    # Shapes implied by fNIRS_T: tokens = 7 region tokens + 53 channels = 60,
    # feature_dim = 2*dim (dim=32 -> 64), mlp_dim = 128.
    batch, seq, dim, hidden = 2, 60, 64, 128

    key = jax.random.PRNGKey(0)
    kx, k1, kb1, k2, kb2, kg, kbt = jax.random.split(key, 7)

    x = jax.random.normal(kx, (batch, seq, dim), dtype=jnp.float32)

    # PyTorch-like init: U(-1/sqrt(fan_in), 1/sqrt(fan_in))
    bound1 = 1.0 / math.sqrt(dim)
    w1 = jax.random.uniform(k1, (hidden, dim), jnp.float32, -bound1, bound1)
    b1 = jax.random.uniform(kb1, (hidden,), jnp.float32, -bound1, bound1)
    bound2 = 1.0 / math.sqrt(hidden)
    w2 = jax.random.uniform(k2, (dim, hidden), jnp.float32, -bound2, bound2)
    b2 = jax.random.uniform(kb2, (dim,), jnp.float32, -bound2, bound2)
    gamma = 1.0 + 0.1 * jax.random.normal(kg, (dim,), jnp.float32)
    beta = 0.1 * jax.random.normal(kbt, (dim,), jnp.float32)

    # Parameter repack happens exactly once, outside the forward path.
    params = prepare_ffn_params(w1, b1, w2, b2, gamma, beta)

    # Fused sub-block: x + FFN(LayerNorm(x))  (Residual(PreNorm(FeedForward)))
    out_block = ffn_block_pallas(x, params, prenorm_residual=True)
    jax.block_until_ready(out_block)
    ref_block = ffn_block_ref(x, gamma, beta, w1, b1, w2, b2)
    assert out_block.shape == (batch, seq, dim)
    assert jnp.allclose(out_block, ref_block, atol=1e-3, rtol=1e-3), \
        "fused prenorm+FFN+residual mismatch vs reference"

    # Bare FeedForward (matches the standalone FeedForward nn.Module).
    out_ffn = ffn_block_pallas(x, params, prenorm_residual=False)
    jax.block_until_ready(out_ffn)
    ref_ffn = ffn_ref(x, w1, b1, w2, b2)
    assert jnp.allclose(out_ffn, ref_ffn, atol=1e-3, rtol=1e-3), \
        "bare FFN mismatch vs reference"

    print("KERNEL_OK")
</pallas_src>

<mosaic_0001>
module attributes {stable_mosaic.version = 11 : i64} {
  func.func @_ffn_kernel(%arg0: i32, %arg1: memref<64x64xf32, #tpu.memory_space<vmem>>, %arg2: memref<1x64xf32, #tpu.memory_space<vmem>>, %arg3: memref<1x64xf32, #tpu.memory_space<vmem>>, %arg4: memref<64x128xf32, #tpu.memory_space<vmem>>, %arg5: memref<1x128xf32, #tpu.memory_space<vmem>>, %arg6: memref<128x64xf32, #tpu.memory_space<vmem>>, %arg7: memref<1x64xf32, #tpu.memory_space<vmem>>, %arg8: memref<64x64xf32, #tpu.memory_space<vmem>>) attributes {dimension_semantics = [#tpu.dimension_semantics<parallel>], iteration_bounds = array<i64: 2>, scalar_prefetch = 0 : i64, scratch_operands = 0 : i64, tpu.core_type = #tpu.core_type<tc>, window_params = [{transform_indices = @transform_0, window_bounds = array<i64: 64, 64>}, {pipeline_mode = #tpu.pipeline_mode<synchronous>, transform_indices = @transform_1, window_bounds = array<i64: 1, 64>}, {pipeline_mode = #tpu.pipeline_mode<synchronous>, transform_indices = @transform_2, window_bounds = array<i64: 1, 64>}, {pipeline_mode = #tpu.pipeline_mode<synchronous>, transform_indices = @transform_3, window_bounds = array<i64: 64, 128>}, {pipeline_mode = #tpu.pipeline_mode<synchronous>, transform_indices = @transform_4, window_bounds = array<i64: 1, 128>}, {pipeline_mode = #tpu.pipeline_mode<synchronous>, transform_indices = @transform_5, window_bounds = array<i64: 128, 64>}, {pipeline_mode = #tpu.pipeline_mode<synchronous>, transform_indices = @transform_6, window_bounds = array<i64: 1, 64>}, {transform_indices = @transform_7, window_bounds = array<i64: 64, 64>}]} {
    %c0 = arith.constant 0 : index
    %c0_0 = arith.constant 0 : index
    %0 = vector.load %arg1[%c0, %c0_0] : memref<64x64xf32, #tpu.memory_space<vmem>>, vector<64x64xf32>
    %cst = arith.constant dense<0.000000e+00> : vector<64xf32>
    %1 = vector.multi_reduction <add>, %0, %cst [1] : vector<64x64xf32> to vector<64xf32>
    %2 = vector.shape_cast %1 : vector<64xf32> to vector<64x1xf32>
    %cst_1 = arith.constant 6.400000e+01 : f32
    %3 = vector.broadcast %cst_1 : f32 to vector<64x1xf32>
    %4 = arith.divf %2, %3 : vector<64x1xf32>
    %5 = vector.broadcast %4 : vector<64x1xf32> to vector<64x64xf32>
    %6 = arith.subf %0, %5 : vector<64x64xf32>
    %7 = arith.mulf %6, %6 : vector<64x64xf32>
    %cst_2 = arith.constant dense<0.000000e+00> : vector<64xf32>
    %8 = vector.multi_reduction <add>, %7, %cst_2 [1] : vector<64x64xf32> to vector<64xf32>
    %9 = vector.shape_cast %8 : vector<64xf32> to vector<64x1xf32>
    %cst_3 = arith.constant 6.400000e+01 : f32
    %10 = vector.broadcast %cst_3 : f32 to vector<64x1xf32>
    %11 = arith.divf %9, %10 : vector<64x1xf32>
    %12 = vector.broadcast %4 : vector<64x1xf32> to vector<64x64xf32>
    %13 = arith.subf %0, %12 : vector<64x64xf32>
    %cst_4 = arith.constant 9.99999974E-6 : f32
    %14 = vector.broadcast %cst_4 : f32 to vector<64x1xf32>
    %15 = arith.addf %11, %14 : vector<64x1xf32>
    %16 = math.rsqrt %15 : vector<64x1xf32>
    %17 = vector.broadcast %16 : vector<64x1xf32> to vector<64x64xf32>
    %18 = arith.mulf %13, %17 : vector<64x64xf32>
    %c0_5 = arith.constant 0 : index
    %c0_6 = arith.constant 0 : index
    %19 = vector.load %arg2[%c0_5, %c0_6] : memref<1x64xf32, #tpu.memory_space<vmem>>, vector<1x64xf32>
    %20 = vector.broadcast %19 : vector<1x64xf32> to vector<64x64xf32>
    %21 = arith.mulf %18, %20 : vector<64x64xf32>
    %c0_7 = arith.constant 0 : index
    %c0_8 = arith.constant 0 : index
    %22 = vector.load %arg3[%c0_7, %c0_8] : memref<1x64xf32, #tpu.memory_space<vmem>>, vector<1x64xf32>
    %23 = vector.broadcast %22 : vector<1x64xf32> to vector<64x64xf32>
    %24 = arith.addf %21, %23 : vector<64x64xf32>
    %c0_9 = arith.constant 0 : index
    %c0_10 = arith.constant 0 : index
    %25 = vector.load %arg4[%c0_9, %c0_10] : memref<64x128xf32, #tpu.memory_space<vmem>>, vector<64x128xf32>
    %cst_11 = arith.constant dense<0.000000e+00> : vector<64x128xf32>
    %26 = tpu.matmul %24, %25, %cst_11 {dimension_numbers = #tpu.dot_dimension_numbers<[1], [0], [0], [1], [0, 0, 1, 1], [], []>} : vector<64x64xf32>, vector<64x128xf32>, vector<64x128xf32> -> vector<64x128xf32>
    %c0_12 = arith.constant 0 : index
    %c0_13 = arith.constant 0 : index
    %27 = vector.load %arg5[%c0_12, %c0_13] : memref<1x128xf32, #tpu.memory_space<vmem>>, vector<1x128xf32>
    %28 = vector.broadcast %27 : vector<1x128xf32> to vector<64x128xf32>
    %29 = arith.addf %26, %28 : vector<64x128xf32>
    %cst_14 = arith.constant 5.000000e-01 : f32
    %30 = vector.broadcast %cst_14 : f32 to vector<64x128xf32>
    %31 = arith.mulf %30, %29 : vector<64x128xf32>
    %cst_15 = arith.constant 0.707106769 : f32
    %32 = vector.broadcast %cst_15 : f32 to vector<64x128xf32>
    %33 = arith.mulf %29, %32 : vector<64x128xf32>
    %34 = math.erf %33 : vector<64x128xf32>
    %cst_16 = arith.constant 1.000000e+00 : f32
    %35 = vector.broadcast %cst_16 : f32 to vector<64x128xf32>
    %36 = arith.addf %35, %34 : vector<64x128xf32>
    %37 = arith.mulf %31, %36 : vector<64x128xf32>
    %c0_17 = arith.constant 0 : index
    %c0_18 = arith.constant 0 : index
    %38 = vector.load %arg6[%c0_17, %c0_18] : memref<128x64xf32, #tpu.memory_space<vmem>>, vector<128x64xf32>
    %cst_19 = arith.constant dense<0.000000e+00> : vector<64x64xf32>
    %39 = tpu.matmul %37, %38, %cst_19 {dimension_numbers = #tpu.dot_dimension_numbers<[1], [0], [0], [1], [0, 0, 1, 1], [], []>} : vector<64x128xf32>, vector<128x64xf32>, vector<64x64xf32> -> vector<64x64xf32>
    %c0_20 = arith.constant 0 : index
    %c0_21 = arith.constant 0 : index
    %40 = vector.load %arg7[%c0_20, %c0_21] : memref<1x64xf32, #tpu.memory_space<vmem>>, vector<1x64xf32>
    %41 = vector.broadcast %40 : vector<1x64xf32> to vector<64x64xf32>
    %42 = arith.addf %39, %41 : vector<64x64xf32>
    %43 = arith.addf %42, %0 : vector<64x64xf32>
    %c0_22 = arith.constant 0 : index
    %c0_23 = arith.constant 0 : index
    %44 = vector.load %arg8[%c0_22, %c0_23] : memref<64x64xf32, #tpu.memory_space<vmem>>, vector<64x64xf32>
    tpu.vector_store %arg8[%c0_22, %c0_23], %43 {strides = array<i32>} : memref<64x64xf32, #tpu.memory_space<vmem>>, vector<64x64xf32>,
    return
  }
  func.func @transform_0(%arg0: i32) -> (i32, i32) {
    %c0_i32 = arith.constant 0 : i32
    %c0_i32_0 = arith.constant 0 : i32
    return %arg0, %c0_i32 : i32, i32
  }
  func.func @transform_1(%arg0: i32) -> (i32, i32) {
    %c0_i32 = arith.constant 0 : i32
    %c0_i32_0 = arith.constant 0 : i32
    %c0_i32_1 = arith.constant 0 : i32
    return %c0_i32, %c0_i32_0 : i32, i32
  }
  func.func @transform_2(%arg0: i32) -> (i32, i32) {
    %c0_i32 = arith.constant 0 : i32
    %c0_i32_0 = arith.constant 0 : i32
    %c0_i32_1 = arith.constant 0 : i32
    return %c0_i32, %c0_i32_0 : i32, i32
  }
  func.func @transform_3(%arg0: i32) -> (i32, i32) {
    %c0_i32 = arith.constant 0 : i32
    %c0_i32_0 = arith.constant 0 : i32
    %c0_i32_1 = arith.constant 0 : i32
    return %c0_i32, %c0_i32_0 : i32, i32
  }
  func.func @transform_4(%arg0: i32) -> (i32, i32) {
    %c0_i32 = arith.constant 0 : i32
    %c0_i32_0 = arith.constant 0 : i32
    %c0_i32_1 = arith.constant 0 : i32
    return %c0_i32, %c0_i32_0 : i32, i32
  }
  func.func @transform_5(%arg0: i32) -> (i32, i32) {
    %c0_i32 = arith.constant 0 : i32
    %c0_i32_0 = arith.constant 0 : i32
    %c0_i32_1 = arith.constant 0 : i32
    return %c0_i32, %c0_i32_0 : i32, i32
  }
  func.func @transform_6(%arg0: i32) -> (i32, i32) {
    %c0_i32 = arith.constant 0 : i32
    %c0_i32_0 = arith.constant 0 : i32
    %c0_i32_1 = arith.constant 0 : i32
    return %c0_i32, %c0_i32_0 : i32, i32
  }
  func.func @transform_7(%arg0: i32) -> (i32, i32) {
    %c0_i32 = arith.constant 0 : i32
    %c0_i32_0 = arith.constant 0 : i32
    return %arg0, %c0_i32 : i32, i32
  }
}

</mosaic_0001>

<llo_original>
// kernel: tpu_custom_call.1
$region0: #{tpu_custom_call.1}
  #allocation0 [shape = 'u32[]', space=smem, size = 0x4, offset = 0x4, fixed_abs, tag = 'smem constant byte address 0x4 - core index']
  #allocation1 [shape = 'u32[144,128]{1,0:T(1,128)}', space=vmem, size = 0x12000, scoped, tag = 'internal scratch']
  %s0 = inlined_call_operand.vmem [shape: f32[120,64], index: 0, kind: input, shape index: {}]
  %s1 = inlined_call_operand.vmem [shape: f32[1,64], index: 1, kind: input, shape index: {}]
  %s2 = inlined_call_operand.vmem [shape: f32[1,64], index: 2, kind: input, shape index: {}]
  %s3 = inlined_call_operand.vmem [shape: f32[64,128], index: 3, kind: input, shape index: {}]
  %s4 = inlined_call_operand.vmem [shape: f32[1,128], index: 4, kind: input, shape index: {}]
  %s5 = inlined_call_operand.vmem [shape: f32[128,64], index: 5, kind: input, shape index: {}]
  %s6 = inlined_call_operand.vmem [shape: f32[1,64], index: 6, kind: input, shape index: {}]
  %s7 = inlined_call_operand.vmem [shape: f32[120,64], index: 7, kind: output, shape index: {}]
  %s8 = sld [smem:[#allocation0]]
  $region109: #{tpu_custom_call.1} parent=0
    _
  %s10 = ssub.s32 1, %s8
  %s11 = scalar_select 0, %s10, %s8
  $region1: #{tpu_custom_call.1} parent=0
    #allocation2 [shape = 'u8[65536]{0}', space=vmem, size = 0x10000, scoped, tag = 'output window, operand 0']
    loop: start=0, step=1, limit=4
    $region2: #{tpu_custom_call.1} parent=1 // loop_pre_header
      _
    $region3: #{tpu_custom_call.1} parent=1 // loop_header
      %s13 = sphi 0, %s17
      %p14 = scmp.ge.s32.totalorder %s13, 4
      %s23 = sphi 0, %s25
      %s26 = sphi 0, %s23
      %s27 = sphi 0, %s26
      %s43 = sphi 0, %s27
      %s47 = sphi 0, %s47
      %s49 = sphi 0, %s47
      %s50 = sphi 0, %s49
      %s64 = sphi 0, %s50
      %s68 = sphi 0, %s68
      %s70 = sphi 0, %s68
      %s71 = sphi 0, %s70
      %s85 = sphi 0, %s71
      %s89 = sphi 0, %s89
      %s91 = sphi 0, %s89
      %s92 = sphi 0, %s91
      %s106 = sphi 0, %s92
      %s110 = sphi 0, %s110
      %s112 = sphi 0, %s110
      %s113 = sphi 0, %s112
      %s127 = sphi 0, %s113
      %s131 = sphi 0, %s131
      %s133 = sphi 0, %s131
      %s134 = sphi 0, %s133
      %s148 = sphi 0, %s134
      %s152 = sphi 0, %s152
      %s154 = sphi 0, %s152
      %s155 = sphi 0, %s154
      %s169 = sphi 0, %s155
      %s175 = sphi 0, %s177
      %s178 = sphi 0, %s175
      %s179 = sphi 0, %s178
      %s195 = sphi 0, %s179
    $region4: #{tpu_custom_call.1} parent=1 // loop_header_branch
      %16 = sbr.rel (%p14) target = $region8
    $region5: #{tpu_custom_call.1} parent=1 // loop_body
      %s18 = ssub.s32 %s13, 1
      %s19 = ssub.s32 %s13, 2
      %s20 = sadd.s32 %s13, 1
      %s21 = ssub.s32 %s13, %s20
      %p22 = scmp.eq.s32.totalorder %s21, 0
      %s24 = sadd.s32 %s23, 1
      %s25 = scalar_select %p22, %s23, %s24
      %p28 = pneg %p22
      %p29 = scmp.eq.s32.totalorder %s13, 1
      %p30 = por %p28, %p29
      %p31 = scmp.ne.s32.totalorder %s23, %s26
      %p32 = scmp.eq.s32.totalorder %s13, 0
      %p33 = por %p31, %p32
      %p34 = scmp.ne.s32.totalorder %s23, %s26
      %p35 = scmp.eq.s32.totalorder %s18, 1
      %p36 = por %p34, %p35
      %p37 = scmp.ne.s32.totalorder %s26, %s27
      %p38 = scmp.eq.s32.totalorder %s18, 0
      %p39 = por %p37, %p38
      %p40 = scmp.ne.s32.totalorder %s26, %s27
      %p41 = scmp.eq.s32.totalorder %s19, 1
      %p42 = por %p40, %p41
      %p44 = scmp.ne.s32.totalorder %s27, %s43
      %p45 = scmp.eq.s32.totalorder %s19, 0
      %p46 = por %p44, %p45
      %s48 = sadd.s32 %s47, 1
      %p51 = scmp.eq.s32.totalorder %s13, 1
      %p52 = scmp.ne.s32.totalorder %s47, %s49
      %p53 = scmp.eq.s32.totalorder %s13, 0
      %p54 = por %p52, %p53
      %p55 = scmp.ne.s32.totalorder %s47, %s49
      %p56 = scmp.eq.s32.totalorder %s18, 1
      %p57 = por %p55, %p56
      %p58 = scmp.ne.s32.totalorder %s49, %s50
      %p59 = scmp.eq.s32.totalorder %s18, 0
      %p60 = por %p58, %p59
      %p61 = scmp.ne.s32.totalorder %s49, %s50
      %p62 = scmp.eq.s32.totalorder %s19, 1
      %p63 = por %p61, %p62
      %p65 = scmp.ne.s32.totalorder %s50, %s64
      %p66 = scmp.eq.s32.totalorder %s19, 0
      %p67 = por %p65, %p66
      %s69 = sadd.s32 %s68, 1
      %p72 = scmp.eq.s32.totalorder %s13, 1
      %p73 = scmp.ne.s32.totalorder %s68, %s70
      %p74 = scmp.eq.s32.totalorder %s13, 0
      %p75 = por %p73, %p74
      %p76 = scmp.ne.s32.totalorder %s68, %s70
      %p77 = scmp.eq.s32.totalorder %s18, 1
      %p78 = por %p76, %p77
      %p79 = scmp.ne.s32.totalorder %s70, %s71
      %p80 = scmp.eq.s32.totalorder %s18, 0
      %p81 = por %p79, %p80
      %p82 = scmp.ne.s32.totalorder %s70, %s71
      %p83 = scmp.eq.s32.totalorder %s19, 1
      %p84 = por %p82, %p83
      %p86 = scmp.ne.s32.totalorder %s71, %s85
      %p87 = scmp.eq.s32.totalorder %s19, 0
      %p88 = por %p86, %p87
      %s90 = sadd.s32 %s89, 1
      %p93 = scmp.eq.s32.totalorder %s13, 1
      %p94 = scmp.ne.s32.totalorder %s89, %s91
      %p95 = scmp.eq.s32.totalorder %s13, 0
      %p96 = por %p94, %p95
      %p97 = scmp.ne.s32.totalorder %s89, %s91
      %p98 = scmp.eq.s32.totalorder %s18, 1
      %p99 = por %p97, %p98
      %p100 = scmp.ne.s32.totalorder %s91, %s92
      %p101 = scmp.eq.s32.totalorder %s18, 0
      %p102 = por %p100, %p101
      %p103 = scmp.ne.s32.totalorder %s91, %s92
      %p104 = scmp.eq.s32.totalorder %s19, 1
      %p105 = por %p103, %p104
      %p107 = scmp.ne.s32.totalorder %s92, %s106
      %p108 = scmp.eq.s32.totalorder %s19, 0
      %p109 = por %p107, %p108
      %s111 = sadd.s32 %s110, 1
      %p114 = scmp.eq.s32.totalorder %s13, 1
      %p115 = scmp.ne.s32.totalorder %s110, %s112
      %p116 = scmp.eq.s32.totalorder %s13, 0
      %p117 = por %p115, %p116
      %p118 = scmp.ne.s32.totalorder %s110, %s112
      %p119 = scmp.eq.s32.totalorder %s18, 1
      %p120 = por %p118, %p119
      %p121 = scmp.ne.s32.totalorder %s112, %s113
      %p122 = scmp.eq.s32.totalorder %s18, 0
      %p123 = por %p121, %p122
      %p124 = scmp.ne.s32.totalorder %s112, %s113
      %p125 = scmp.eq.s32.totalorder %s19, 1
      %p126 = por %p124, %p125
      %p128 = scmp.ne.s32.totalorder %s113, %s127
      %p129 = scmp.eq.s32.totalorder %s19, 0
      %p130 = por %p128, %p129
      %s132 = sadd.s32 %s131, 1
      %p135 = scmp.eq.s32.totalorder %s13, 1
      %p136 = scmp.ne.s32.totalorder %s131, %s133
      %p137 = scmp.eq.s32.totalorder %s13, 0
      %p138 = por %p136, %p137
      %p139 = scmp.ne.s32.totalorder %s131, %s133
      %p140 = scmp.eq.s32.totalorder %s18, 1
      %p141 = por %p139, %p140
      %p142 = scmp.ne.s32.totalorder %s133, %s134
      %p143 = scmp.eq.s32.totalorder %s18, 0
      %p144 = por %p142, %p143
      %p145 = scmp.ne.s32.totalorder %s133, %s134
      %p146 = scmp.eq.s32.totalorder %s19, 1
      %p147 = por %p145, %p146
      %p149 = scmp.ne.s32.totalorder %s134, %s148
      %p150 = scmp.eq.s32.totalorder %s19, 0
      %p151 = por %p149, %p150
      %s153 = sadd.s32 %s152, 1
      %p156 = scmp.eq.s32.totalorder %s13, 1
      %p157 = scmp.ne.s32.totalorder %s152, %s154
      %p158 = scmp.eq.s32.totalorder %s13, 0
      %p159 = por %p157, %p158
      %p160 = scmp.ne.s32.totalorder %s152, %s154
      %p161 = scmp.eq.s32.totalorder %s18, 1
      %p162 = por %p160, %p161
      %p163 = scmp.ne.s32.totalorder %s154, %s155
      %p164 = scmp.eq.s32.totalorder %s18, 0
      %p165 = por %p163, %p164
      %p166 = scmp.ne.s32.totalorder %s154, %s155
      %p167 = scmp.eq.s32.totalorder %s19, 1
      %p168 = por %p166, %p167
      %p170 = scmp.ne.s32.totalorder %s155, %s169
      %p171 = scmp.eq.s32.totalorder %s19, 0
      %p172 = por %p170, %p171
      %s173 = ssub.s32 %s13, %s20
      %p174 = scmp.eq.s32.totalorder %s173, 0
      %s176 = sadd.s32 %s175, 1
      %s177 = scalar_select %p174, %s175, %s176
      %p180 = pneg %p174
      %p181 = scmp.eq.s32.totalorder %s13, 1
      %p182 = por %p180, %p181
      %p183 = scmp.ne.s32.totalorder %s175, %s178
      %p184 = scmp.eq.s32.totalorder %s13, 0
      %p185 = por %p183, %p184
      %p186 = scmp.ne.s32.totalorder %s175, %s178
      %p187 = scmp.eq.s32.totalorder %s18, 1
      %p188 = por %p186, %p187
      %p189 = scmp.ne.s32.totalorder %s178, %s179
      %p190 = scmp.eq.s32.totalorder %s18, 0
      %p191 = por %p189, %p190
      %p192 = scmp.ne.s32.totalorder %s178, %s179
      %p193 = scmp.eq.s32.totalorder %s19, 1
      %p194 = por %p192, %p193
      %p196 = scmp.ne.s32.totalorder %s179, %s195
      %p197 = scmp.eq.s32.totalorder %s19, 0
      %p198 = por %p196, %p197
      %p199 = scmp.le.s32.totalorder 1, %s13
      %p200 = scmp.lt.s32.totalorder %s13, 3
      %p201 = pnand %p199, %p200
      %p202 = pneg %p201
      // Predicated region
      $region9: #{tpu_custom_call.1} parent=5 // pred_check
        _
      $region10: #{tpu_custom_call.1} parent=5 // pred_check_branch
        %204 = sbr.rel (%p201) target = $region12
      $region11: #{tpu_custom_call.1} parent=5 // pred_region
        %s205 = ssub.s32 %s13, 1
        // Predicated region
        $region13: #{tpu_custom_call.1} parent=11 // pred_check
          %p206 = pneg %p60
        $region14: #{tpu_custom_call.1} parent=11 // pred_check_branch
          %208 = sbr.rel (%p206) target = $region16
        $region15: #{tpu_custom_call.1} parent=11 // pred_region
          _
        $region16: #{tpu_custom_call.1} parent=11 // pred_fallthru
          _
        // Predicated region
        $region17: #{tpu_custom_call.1} parent=11 // pred_check
          %p209 = pneg %p81
        $region18: #{tpu_custom_call.1} parent=11 // pred_check_branch
          %211 = sbr.rel (%p209) target = $region20
        $region19: #{tpu_custom_call.1} parent=11 // pred_region
          _
        $region20: #{tpu_custom_call.1} parent=11 // pred_fallthru
          _
        // Predicated region
        $region21: #{tpu_custom_call.1} parent=11 // pred_check
          %p212 = pneg %p102
        $region22: #{tpu_custom_call.1} parent=11 // pred_check_branch
          %214 = sbr.rel (%p212) target = $region24
        $region23: #{tpu_custom_call.1} parent=11 // pred_region
          _
        $region24: #{tpu_custom_call.1} parent=11 // pred_fallthru
          _
        // Predicated region
        $region25: #{tpu_custom_call.1} parent=11 // pred_check
          %p215 = pneg %p123
        $region26: #{tpu_custom_call.1} parent=11 // pred_check_branch
          %217 = sbr.rel (%p215) target = $region28
        $region27: #{tpu_custom_call.1} parent=11 // pred_region
          _
        $region28: #{tpu_custom_call.1} parent=11 // pred_fallthru
          _
        // Predicated region
        $region29: #{tpu_custom_call.1} parent=11 // pred_check
          %p218 = pneg %p144
        $region30: #{tpu_custom_call.1} parent=11 // pred_check_branch
          %220 = sbr.rel (%p218) target = $region32
        $region31: #{tpu_custom_call.1} parent=11 // pred_region
          _
        $region32: #{tpu_custom_call.1} parent=11 // pred_fallthru
          _
        // Predicated region
        $region33: #{tpu_custom_call.1} parent=11 // pred_check
          %p221 = pneg %p165
        $region34: #{tpu_custom_call.1} parent=11 // pred_check_branch
          %223 = sbr.rel (%p221) target = $region36
        $region35: #{tpu_custom_call.1} parent=11 // pred_region
          _
        $region36: #{tpu_custom_call.1} parent=11 // pred_fallthru
          _
      $region12: #{tpu_custom_call.1} parent=5 // pred_fallthru
        _
      %p224 = scmp.lt.s32.totalorder %s13, 2
      // Predicated region
      $region37: #{tpu_custom_call.1} parent=5 // pred_check
        %p225 = pneg %p224
      $region38: #{tpu_custom_call.1} parent=5 // pred_check_branch
        %227 = sbr.rel (%p225) target = $region40
      $region39: #{tpu_custom_call.1} parent=5 // pred_region
        // Predicated region
        $region41: #{tpu_custom_call.1} parent=39 // pred_check
          %p228 = pneg %p33
        $region42: #{tpu_custom_call.1} parent=39 // pred_check_branch
          %230 = sbr.rel (%p228) target = $region44
        $region43: #{tpu_custom_call.1} parent=39 // pred_region
          %s231 = smul.u32 8, %s13
          %s232 = ssub.s32 15, %s231
          %p233 = scmp.lt.s32.totalorder %s232, 8
          %s234 = scalar_select %p233, %s232, 8
          %s235 = smul.u32 128, %s234
          %p236 = scmp.lt.s32.totalorder %s231, 14
          %s237 = scalar_select %p236, %s231, 14
          %s238 = smul.addr %s237, 8
          %s239 = scalar_lea.vmem %s0, %s238
          %s240 = smul.u32 8, %s13
          %s241 = ssub.s32 15, %s240
          %p242 = scmp.lt.s32.totalorder %s241, 8
          %s243 = scalar_select %p242, %s241, 8
          %s244 = smul.u32 128, %s243
        $region44: #{tpu_custom_call.1} parent=39 // pred_fallthru
          _
      $region40: #{tpu_custom_call.1} parent=5 // pred_fallthru
        _
      %p245 = scmp.le.s32.totalorder 1, %s13
      %p246 = scmp.lt.s32.totalorder %s13, 3
      %p247 = pnand %p245, %p246
      %p248 = pneg %p247
      // Predicated region
      $region45: #{tpu_custom_call.1} parent=5 // pred_check
        _
      $region46: #{tpu_custom_call.1} parent=5 // pred_check_branch
        %250 = sbr.rel (%p247) target = $region48
      $region47: #{tpu_custom_call.1} parent=5 // pred_region
        %s251 = ssub.s32 %s13, 1
        %s252 = smul.u32 8, %s18
        %s253 = ssub.s32 15, %s252
        %p254 = scmp.lt.s32.totalorder %s253, 8
        %s255 = scalar_select %p254, %s253, 8
        %s256 = smul.u32 128, %s255
        %p257 = scmp.lt.s32.totalorder %s252, 14
        %s258 = scalar_select %p257, %s252, 14
        %s259 = smul.addr %s258, 8
        %s260 = scalar_lea.vmem %s0, %s259
        %p261 = pneg %p39
        %p262 = pneg %p36
        %p263 = pneg %p60
        %p264 = pneg %p57
        %p265 = pneg %p81
        %p266 = pneg %p78
        %p267 = pneg %p102
        %p268 = pneg %p99
        %p269 = pneg %p123
        %p270 = pneg %p120
        %p271 = pneg %p144
        %p272 = pneg %p141
        %p273 = pneg %p165
        %p274 = pneg %p162
        %p275 = pneg %p191
        %p276 = pneg %p188
        %s277 = sand.u32 %s178, 1
        %s278 = sand.u32 %s178, 1
        %s279 = smul.addr %s278, 64
        %s280 = scalar_lea.vmem [#allocation2], %s279
        %s281 = smul.u32 8, %s18
        %s282 = ssub.s32 15, %s281
        %p283 = scmp.lt.s32.totalorder %s282, 8
        %s284 = scalar_select %p283, %s282, 8
        %s285 = smul.u32 128, %s284
        %p286 = scmp.lt.s32.totalorder %s281, 14
        %s287 = scalar_select %p286, %s281, 14
        %s288 = smul.addr %s287, 8
        %s289 = scalar_lea.vmem %s0, %s288
        %s290 = smul.u32 8, %s18
        %s291 = ssub.s32 15, %s290
        %p292 = scmp.lt.s32.totalorder %s291, 8
        %s293 = scalar_select %p292, %s291, 8
        %s294 = smul.u32 128, %s293
        %s295 = smul.u32 8, %s18
        %s296 = ssub.s32 15, %s295
        %p297 = scmp.lt.s32.totalorder %s296, 8
        %s298 = scalar_select %p297, %s296, 8
        %s299 = smul.u32 128, %s298
        %v300 = vld [vmem:[%s289] sm:$0xff]
        %v301 = vld [vmem:[%s289 + $0x8] sm:$0xff]
        %v302 = vld [vmem:[%s289 + $0x10] sm:$0xff]
        %v303 = vld [vmem:[%s289 + $0x18] sm:$0xff]
        %v304 = vld [vmem:[%s289 + $0x20] sm:$0xff]
        %v305 = vld [vmem:[%s289 + $0x28] sm:$0xff]
        %v306 = vld [vmem:[%s289 + $0x30] sm:$0xff]
        %v307 = vld [vmem:[%s289 + $0x38] sm:$0xff]
        %vm308 = vcmask 523264
        %v309 = vsel %vm308, %v300, 0.0
        %310 = vadd.xlane.f32.xlu0 %v309
        %v311 = vpop.xlane.xlu0 %310
        %v312 = vsel %vm308, %v301, 0.0
        %313 = vadd.xlane.f32.xlu0 %v312
        %v314 = vpop.xlane.xlu0 %313
        %v315 = vsel %vm308, %v302, 0.0
        %316 = vadd.xlane.f32.xlu0 %v315
        %v317 = vpop.xlane.xlu0 %316
        %v318 = vsel %vm308, %v303, 0.0
        %319 = vadd.xlane.f32.xlu0 %v318
        %v320 = vpop.xlane.xlu0 %319
        %v321 = vsel %vm308, %v304, 0.0
        %322 = vadd.xlane.f32.xlu0 %v321
        %v323 = vpop.xlane.xlu0 %322
        %v324 = vsel %vm308, %v305, 0.0
        %325 = vadd.xlane.f32.xlu0 %v324
        %v326 = vpop.xlane.xlu0 %325
        %v327 = vsel %vm308, %v306, 0.0
        %328 = vadd.xlane.f32.xlu0 %v327
        %v329 = vpop.xlane.xlu0 %328
        %v330 = vsel %vm308, %v307, 0.0
        %331 = vadd.xlane.f32.xlu0 %v330
        %v332 = vpop.xlane.xlu0 %331
        %v333 = vrcp.pop 64.0
        %v334 = vmul.f32 %v311, %v333
        %v335 = vmul.f32 %v314, %v333
        %v336 = vmul.f32 %v317, %v333
        %v337 = vmul.f32 %v320, %v333
        %v338 = vmul.f32 %v323, %v333
        %v339 = vmul.f32 %v326, %v333
        %v340 = vmul.f32 %v329, %v333
        %v341 = vmul.f32 %v332, %v333
        %v342 = vsub.f32 %v300, %v334
        %v343 = vsub.f32 %v301, %v335
        %v344 = vsub.f32 %v302, %v336
        %v345 = vsub.f32 %v303, %v337
        %v346 = vsub.f32 %v304, %v338
        %v347 = vsub.f32 %v305, %v339
        %v348 = vsub.f32 %v306, %v340
        %v349 = vsub.f32 %v307, %v341
        %v350 = vmul.f32 %v342, %v342
        %v351 = vmul.f32 %v343, %v343
        %v352 = vmul.f32 %v344, %v344
        %v353 = vmul.f32 %v345, %v345
        %v354 = vmul.f32 %v346, %v346
        %v355 = vmul.f32 %v347, %v347
        %v356 = vmul.f32 %v348, %v348
        %v357 = vmul.f32 %v349, %v349
        %v358 = vsel %vm308, %v350, 0.0
        %359 = vadd.xlane.f32.xlu0 %v358
        %v360 = vpop.xlane.xlu0 %359
        %v361 = vsel %vm308, %v351, 0.0
        %362 = vadd.xlane.f32.xlu0 %v361
        %v363 = vpop.xlane.xlu0 %362
        %v364 = vsel %vm308, %v352, 0.0
        %365 = vadd.xlane.f32.xlu0 %v364
        %v366 = vpop.xlane.xlu0 %365
        %v367 = vsel %vm308, %v353, 0.0
        %368 = vadd.xlane.f32.xlu0 %v367
        %v369 = vpop.xlane.xlu0 %368
        %v370 = vsel %vm308, %v354, 0.0
        %371 = vadd.xlane.f32.xlu0 %v370
        %v372 = vpop.xlane.xlu0 %371
        %v373 = vsel %vm308, %v355, 0.0
        %374 = vadd.xlane.f32.xlu0 %v373
        %v375 = vpop.xlane.xlu0 %374
        %v376 = vsel %vm308, %v356, 0.0
        %377 = vadd.xlane.f32.xlu0 %v376
        %v378 = vpop.xlane.xlu0 %377
        %v379 = vsel %vm308, %v357, 0.0
        %380 = vadd.xlane.f32.xlu0 %v379
        %v381 = vpop.xlane.xlu0 %380
        %v382 = vmul.f32 %v360, %v333
        %v383 = vmul.f32 %v363, %v333
        %v384 = vmul.f32 %v366, %v333
        %v385 = vmul.f32 %v369, %v333
        %v386 = vmul.f32 %v372, %v333
        %v387 = vmul.f32 %v375, %v333
        %v388 = vmul.f32 %v378, %v333
        %v389 = vmul.f32 %v381, %v333
        %v390 = vadd.f32 %v382, 1e-05
        %v391 = vadd.f32 %v383, 1e-05
        %v392 = vadd.f32 %v384, 1e-05
        %v393 = vadd.f32 %v385, 1e-05
        %v394 = vadd.f32 %v386, 1e-05
        %v395 = vadd.f32 %v387, 1e-05
        %v396 = vadd.f32 %v388, 1e-05
        %v397 = vadd.f32 %v389, 1e-05
        %v398 = vrsqrt.pop %v390
        %v399 = vrsqrt.pop %v391
        %v400 = vrsqrt.pop %v392
        %v401 = vrsqrt.pop %v393
        %v402 = vrsqrt.pop %v394
        %v403 = vrsqrt.pop %v395
        %v404 = vrsqrt.pop %v396
        %v405 = vrsqrt.pop %v397
        %v406 = vmul.f32 %v342, %v398
        %v407 = vmul.f32 %v343, %v399
        %v408 = vmul.f32 %v344, %v400
        %v409 = vmul.f32 %v345, %v401
        %v410 = vmul.f32 %v346, %v402
        %v411 = vmul.f32 %v347, %v403
        %v412 = vmul.f32 %v348, %v404
        %v413 = vmul.f32 %v349, %v405
        %v414 = vld [vmem:[%s1] sm:$0x1]
        %v416 = vlaneseq
        %v417 = vshrl.u32 %v416, 7
        %v418 = vsub.s32 0, %v417
        %v419 = vrot.slane %v414, %v418
        %v421 = vmul.f32 %v406, %v419
        %v422 = vmul.f32 %v407, %v419
        %v423 = vmul.f32 %v408, %v419
        %v424 = vmul.f32 %v409, %v419
        %v425 = vmul.f32 %v410, %v419
        %v426 = vmul.f32 %v411, %v419
        %v427 = vmul.f32 %v412, %v419
        %v428 = vmul.f32 %v413, %v419
        %v429 = vld [vmem:[%s2] sm:$0x1]
        %v431 = vlaneseq
        %v432 = vshrl.u32 %v431, 7
        %v433 = vsub.s32 0, %v432
        %v434 = vrot.slane %v429, %v433
        %v436 = vadd.f32 %v421, %v434
        %v437 = vadd.f32 %v422, %v434
        %v438 = vadd.f32 %v423, %v434
        %v439 = vadd.f32 %v424, %v434
        %v440 = vadd.f32 %v425, %v434
        %v441 = vadd.f32 %v426, %v434
        %v442 = vadd.f32 %v427, %v434
        %v443 = vadd.f32 %v428, %v434
        %v444 = vld [vmem:[%s3] sm:$0xff]
        %v445 = vld [vmem:[%s3 + $0x8] sm:$0xff]
        %v446 = vld [vmem:[%s3 + $0x10] sm:$0xff]
        %v447 = vld [vmem:[%s3 + $0x18] sm:$0xff]
        %v448 = vld [vmem:[%s3 + $0x20] sm:$0xff]
        %v449 = vld [vmem:[%s3 + $0x28] sm:$0xff]
        %v450 = vld [vmem:[%s3 + $0x30] sm:$0xff]
        %v451 = vld [vmem:[%s3 + $0x38] sm:$0xff]
        %v452 = vld [vmem:[%s4] sm:$0x1]
        %v454 = vlaneseq
        %v455 = vshrl.u32 %v454, 7
        %v456 = vsub.s32 0, %v455
        %v457 = vrot.slane %v452, %v456
        %v460 = vsel %vm308, %v436, 0
        %v463 = vsel %vm308, %v437, 0
        %v466 = vsel %vm308, %v438, 0
        %v469 = vsel %vm308, %v439, 0
        %v472 = vsel %vm308, %v440, 0
        %v475 = vsel %vm308, %v441, 0
        %v478 = vsel %vm308, %v442, 0
        %v481 = vsel %vm308, %v443, 0
        %483 = vmatprep.subr.mxu0 0.0
        %484 = vmatpush1.msra.mxu0 %v444
        %485 = vmatprep.subr.mxu0 0.0
        %486 = vmatpush1.msra.mxu0 %v445
        %487 = vmatprep.subr.mxu0 0.0
        %488 = vmatpush1.msra.mxu0 %v446
        %489 = vmatprep.subr.mxu0 0.0
        %490 = vmatpush1.msra.mxu0 %v447
        %491 = vmatprep.subr.mxu0 0.0
        %492 = vmatpush1.msra.mxu0 %v448
        %493 = vmatprep.subr.mxu0 0.0
        %494 = vmatpush1.msra.mxu0 %v449
        %495 = vmatprep.subr.mxu0 0.0
        %496 = vmatpush1.msra.mxu0 %v450
        %497 = vmatprep.subr.mxu0 0.0
        %498 = vmatpush1.msra.mxu0 %v451
        %499 = vmatprep.subr.mxu0 0.0
        %500 = vmatpush1.msra.mxu0 0.0
        %501 = vmatprep.subr.mxu0 0.0
        %502 = vmatpush1.msra.mxu0 0.0
        %503 = vmatprep.subr.mxu0 0.0
        %504 = vmatpush1.msra.mxu0 0.0
        %505 = vmatprep.subr.mxu0 0.0
        %506 = vmatpush1.msra.mxu0 0.0
        %507 = vmatprep.subr.mxu0 0.0
        %508 = vmatpush1.msra.mxu0 0.0
        %509 = vmatprep.subr.mxu0 0.0
        %510 = vmatpush1.msra.mxu0 0.0
        %511 = vmatprep.subr.mxu0 0.0
        %512 = vmatpush1.msra.mxu0 0.0
        %513 = vmatprep.subr.mxu0 0.0
        %514 = vmatpush1.msra.mxu0 0.0
        %515 = vmatprep.subr.mxu0 0.0
        %516 = vmatpush1.msra.mxu0 0.0
        %517 = vmatprep.subr.mxu0 0.0
        %518 = vmatpush1.msra.mxu0 0.0
        %519 = vmatprep.subr.mxu0 0.0
        %520 = vmatpush1.msra.mxu0 0.0
        %521 = vmatprep.subr.mxu0 0.0
        %522 = vmatpush1.msra.mxu0 0.0
        %523 = vmatprep.subr.mxu0 0.0
        %524 = vmatpush1.msra.mxu0 0.0
        %525 = vmatprep.subr.mxu0 0.0
        %526 = vmatpush1.msra.mxu0 0.0
        %527 = vmatprep.subr.mxu0 0.0
        %528 = vmatpush1.msra.mxu0 0.0
        %529 = vmatprep.subr.mxu0 0.0
        %530 = vmatpush1.msra.mxu0 0.0
        %531 = vmatprep.subr.mxu0 0.0
        %532 = vmatpush1.msra.mxu0 0.0
        %533 = vmatprep.subr.mxu0 0.0
        %534 = vmatpush1.msra.mxu0 0.0
        %535 = vmatprep.subr.mxu0 0.0
        %536 = vmatpush1.msra.mxu0 0.0
        %537 = vmatprep.subr.mxu0 0.0
        %538 = vmatpush1.msra.mxu0 0.0
        %539 = vmatprep.subr.mxu0 0.0
        %540 = vmatpush1.msra.mxu0 0.0
        %541 = vmatprep.subr.mxu0 0.0
        %542 = vmatpush1.msra.mxu0 0.0
        %543 = vmatprep.subr.mxu0 0.0
        %544 = vmatpush1.msra.mxu0 0.0
        %545 = vmatprep.subr.mxu0 0.0
        %546 = vmatpush1.msra.mxu0 0.0
        %547 = vmatprep.mubr.f32.mxu0 0.0
        %548 = vmatmul.mubr.f32.gmra.mrb[0].mxu0 %v460
        %v549 = vpop.f32.mrb[0].mxu0
        %v550 = vadd.f32 %v457, %v549
        %v551 = vpop.f32.mrb[0].mxu0
        %552 = vmatprep.mubr.f32.mxu0 0.0
        %553 = vmatmul.mubr.f32.gmra.mrb[0].mxu0 %v463
        %v554 = vpop.f32.mrb[0].mxu0
        %v555 = vadd.f32 %v457, %v554
        %v556 = vpop.f32.mrb[0].mxu0
        %557 = vmatprep.mubr.f32.mxu0 0.0
        %558 = vmatmul.mubr.f32.gmra.mrb[0].mxu0 %v466
        %v559 = vpop.f32.mrb[0].mxu0
        %v560 = vadd.f32 %v457, %v559
        %v561 = vpop.f32.mrb[0].mxu0
        %562 = vmatprep.mubr.f32.mxu0 0.0
        %563 = vmatmul.mubr.f32.gmra.mrb[0].mxu0 %v469
        %v564 = vpop.f32.mrb[0].mxu0
        %v565 = vadd.f32 %v457, %v564
        %v566 = vpop.f32.mrb[0].mxu0
        %567 = vmatprep.mubr.f32.mxu0 0.0
        %568 = vmatmul.mubr.f32.gmra.mrb[0].mxu0 %v472
        %v569 = vpop.f32.mrb[0].mxu0
        %v570 = vadd.f32 %v457, %v569
        %v571 = vpop.f32.mrb[0].mxu0
        %572 = vmatprep.mubr.f32.mxu0 0.0
        %573 = vmatmul.mubr.f32.gmra.mrb[0].mxu0 %v475
        %v574 = vpop.f32.mrb[0].mxu0
        %v575 = vadd.f32 %v457, %v574
        %v576 = vpop.f32.mrb[0].mxu0
        %577 = vmatprep.mubr.f32.mxu0 0.0
        %578 = vmatmul.mubr.f32.gmra.mrb[0].mxu0 %v478
        %v579 = vpop.f32.mrb[0].mxu0
        %v580 = vadd.f32 %v457, %v579
        %v581 = vpop.f32.mrb[0].mxu0
        %582 = vmatprep.mubr.f32.mxu0 0.0
        %583 = vmatmul.mubr.f32.gmra.mrb[0].mxu0 %v481
        %v584 = vpop.f32.mrb[0].mxu0
        %v585 = vadd.f32 %v457, %v584
        %v586 = vpop.f32.mrb[0].mxu0
        %587 = vdwg.mxu0
        %v588 = vmul.f32 %v550, 0.5
        %v589 = vmul.f32 %v555, 0.5
        %v590 = vmul.f32 %v560, 0.5
        %v591 = vmul.f32 %v565, 0.5
        %v592 = vmul.f32 %v570, 0.5
        %v593 = vmul.f32 %v575, 0.5
        %v594 = vmul.f32 %v580, 0.5
        %v595 = vmul.f32 %v585, 0.5
        %v596 = vmul.f32 %v550, 0.70710677
        %v597 = vmul.f32 %v555, 0.70710677
        %v598 = vmul.f32 %v560, 0.70710677
        %v599 = vmul.f32 %v565, 0.70710677
        %v600 = vmul.f32 %v570, 0.70710677
        %v601 = vmul.f32 %v575, 0.70710677
        %v602 = vmul.f32 %v580, 0.70710677
        %v603 = vmul.f32 %v585, 0.70710677
        %v604 = verf.f32.pop %v596
        %v605 = verf.f32.pop %v597
        %v606 = verf.f32.pop %v598
        %v607 = verf.f32.pop %v599
        %v608 = verf.f32.pop %v600
        %v609 = verf.f32.pop %v601
        %v610 = verf.f32.pop %v602
        %v611 = verf.f32.pop %v603
        %v612 = vadd.f32 %v604, 1.0
        %v613 = vadd.f32 %v605, 1.0
        %v614 = vadd.f32 %v606, 1.0
        %v615 = vadd.f32 %v607, 1.0
        %v616 = vadd.f32 %v608, 1.0
        %v617 = vadd.f32 %v609, 1.0
        %v618 = vadd.f32 %v610, 1.0
        %v619 = vadd.f32 %v611, 1.0
        %v620 = vmul.f32 %v588, %v612
        %v621 = vmul.f32 %v589, %v613
        %v622 = vmul.f32 %v590, %v614
        %v623 = vmul.f32 %v591, %v615
        %v624 = vmul.f32 %v592, %v616
        %v625 = vmul.f32 %v593, %v617
        %v626 = vmul.f32 %v594, %v618
        %v627 = vmul.f32 %v595, %v619
        %v628 = vld [vmem:[%s5] sm:$0xff]
        %v629 = vld [vmem:[%s5 + $0x8] sm:$0xff]
        %v630 = vld [vmem:[%s5 + $0x10] sm:$0xff]
        %v631 = vld [vmem:[%s5 + $0x18] sm:$0xff]
        %v632 = vld [vmem:[%s5 + $0x20] sm:$0xff]
        %v633 = vld [vmem:[%s5 + $0x28] sm:$0xff]
        %v634 = vld [vmem:[%s5 + $0x30] sm:$0xff]
        %v635 = vld [vmem:[%s5 + $0x38] sm:$0xff]
        %v636 = vld [vmem:[%s5 + $0x40] sm:$0xff]
        %v637 = vld [vmem:[%s5 + $0x48] sm:$0xff]
        %v638 = vld [vmem:[%s5 + $0x50] sm:$0xff]
        %v639 = vld [vmem:[%s5 + $0x58] sm:$0xff]
        %v640 = vld [vmem:[%s5 + $0x60] sm:$0xff]
        %v641 = vld [vmem:[%s5 + $0x68] sm:$0xff]
        %v642 = vld [vmem:[%s5 + $0x70] sm:$0xff]
        %v643 = vld [vmem:[%s5 + $0x78] sm:$0xff]
        %v644 = vld [vmem:[%s6] sm:$0x1]
        %v646 = vlaneseq
        %v647 = vshrl.u32 %v646, 7
        %v648 = vsub.s32 0, %v647
        %v649 = vrot.slane %v644, %v648
        %651 = vmatprep.subr.mxu0 0.0
        %652 = vmatpush1.msra.mxu0 %v628
        %653 = vmatprep.subr.mxu0 0.0
        %654 = vmatpush1.msra.mxu0 %v629
        %655 = vmatprep.subr.mxu0 0.0
        %656 = vmatpush1.msra.mxu0 %v630
        %657 = vmatprep.subr.mxu0 0.0
        %658 = vmatpush1.msra.mxu0 %v631
        %659 = vmatprep.subr.mxu0 0.0
        %660 = vmatpush1.msra.mxu0 %v632
        %661 = vmatprep.subr.mxu0 0.0
        %662 = vmatpush1.msra.mxu0 %v633
        %663 = vmatprep.subr.mxu0 0.0
        %664 = vmatpush1.msra.mxu0 %v634
        %665 = vmatprep.subr.mxu0 0.0
        %666 = vmatpush1.msra.mxu0 %v635
        %667 = vmatprep.subr.mxu0 0.0
        %668 = vmatpush1.msra.mxu0 %v636
        %669 = vmatprep.subr.mxu0 0.0
        %670 = vmatpush1.msra.mxu0 %v637
        %671 = vmatprep.subr.mxu0 0.0
        %672 = vmatpush1.msra.mxu0 %v638
        %673 = vmatprep.subr.mxu0 0.0
        %674 = vmatpush1.msra.mxu0 %v639
        %675 = vmatprep.subr.mxu0 0.0
        %676 = vmatpush1.msra.mxu0 %v640
        %677 = vmatprep.subr.mxu0 0.0
        %678 = vmatpush1.msra.mxu0 %v641
        %679 = vmatprep.subr.mxu0 0.0
        %680 = vmatpush1.msra.mxu0 %v642
        %681 = vmatprep.subr.mxu0 0.0
        %682 = vmatpush1.msra.mxu0 %v643
        %683 = vmatprep.subr.mxu0 0.0
        %684 = vmatpush1.msra.mxu0 0.0
        %685 = vmatprep.subr.mxu0 0.0
        %686 = vmatpush1.msra.mxu0 0.0
        %687 = vmatprep.subr.mxu0 0.0
        %688 = vmatpush1.msra.mxu0 0.0
        %689 = vmatprep.subr.mxu0 0.0
        %690 = vmatpush1.msra.mxu0 0.0
        %691 = vmatprep.subr.mxu0 0.0
        %692 = vmatpush1.msra.mxu0 0.0
        %693 = vmatprep.subr.mxu0 0.0
        %694 = vmatpush1.msra.mxu0 0.0
        %695 = vmatprep.subr.mxu0 0.0
        %696 = vmatpush1.msra.mxu0 0.0
        %697 = vmatprep.subr.mxu0 0.0
        %698 = vmatpush1.msra.mxu0 0.0
        %699 = vmatprep.subr.mxu0 0.0
        %700 = vmatpush1.msra.mxu0 0.0
        %701 = vmatprep.subr.mxu0 0.0
        %702 = vmatpush1.msra.mxu0 0.0
        %703 = vmatprep.subr.mxu0 0.0
        %704 = vmatpush1.msra.mxu0 0.0
        %705 = vmatprep.subr.mxu0 0.0
        %706 = vmatpush1.msra.mxu0 0.0
        %707 = vmatprep.subr.mxu0 0.0
        %708 = vmatpush1.msra.mxu0 0.0
        %709 = vmatprep.subr.mxu0 0.0
        %710 = vmatpush1.msra.mxu0 0.0
        %711 = vmatprep.subr.mxu0 0.0
        %712 = vmatpush1.msra.mxu0 0.0
        %713 = vmatprep.subr.mxu0 0.0
        %714 = vmatpush1.msra.mxu0 0.0
        %715 = vmatprep.mubr.f32.mxu0 0.0
        %716 = vmatmul.mubr.f32.gmra.mrb[0].mxu0 %v620
        %v717 = vpop.f32.mrb[0].mxu0
        %v718 = vadd.f32 %v649, %v717
        %v719 = vpop.f32.mrb[0].mxu0
        %720 = vmatprep.mubr.f32.mxu0 0.0
        %721 = vmatmul.mubr.f32.gmra.mrb[0].mxu0 %v621
        %v722 = vpop.f32.mrb[0].mxu0
        %v723 = vadd.f32 %v649, %v722
        %v724 = vpop.f32.mrb[0].mxu0
        %725 = vmatprep.mubr.f32.mxu0 0.0
        %726 = vmatmul.mubr.f32.gmra.mrb[0].mxu0 %v622
        %v727 = vpop.f32.mrb[0].mxu0
        %v728 = vadd.f32 %v649, %v727
        %v729 = vpop.f32.mrb[0].mxu0
        %730 = vmatprep.mubr.f32.mxu0 0.0
        %731 = vmatmul.mubr.f32.gmra.mrb[0].mxu0 %v623
        %v732 = vpop.f32.mrb[0].mxu0
        %v733 = vadd.f32 %v649, %v732
        %v734 = vpop.f32.mrb[0].mxu0
        %735 = vmatprep.mubr.f32.mxu0 0.0
        %736 = vmatmul.mubr.f32.gmra.mrb[0].mxu0 %v624
        %v737 = vpop.f32.mrb[0].mxu0
        %v738 = vadd.f32 %v649, %v737
        %v739 = vpop.f32.mrb[0].mxu0
        %740 = vmatprep.mubr.f32.mxu0 0.0
        %741 = vmatmul.mubr.f32.gmra.mrb[0].mxu0 %v625
        %v742 = vpop.f32.mrb[0].mxu0
        %v743 = vadd.f32 %v649, %v742
        %v744 = vpop.f32.mrb[0].mxu0
        %745 = vmatprep.mubr.f32.mxu0 0.0
        %746 = vmatmul.mubr.f32.gmra.mrb[0].mxu0 %v626
        %v747 = vpop.f32.mrb[0].mxu0
        %v748 = vadd.f32 %v649, %v747
        %v749 = vpop.f32.mrb[0].mxu0
        %750 = vmatprep.mubr.f32.mxu0 0.0
        %751 = vmatmul.mubr.f32.gmra.mrb[0].mxu0 %v627
        %v752 = vpop.f32.mrb[0].mxu0
        %v753 = vadd.f32 %v649, %v752
        %v754 = vpop.f32.mrb[0].mxu0
        %755 = vdwg.mxu0
        %v756 = vadd.f32 %v718, %v300
        %v757 = vadd.f32 %v723, %v301
        %v758 = vadd.f32 %v728, %v302
        %v759 = vadd.f32 %v733, %v303
        %v760 = vadd.f32 %v738, %v304
        %v761 = vadd.f32 %v743, %v305
        %v762 = vadd.f32 %v748, %v306
        %v763 = vadd.f32 %v753, %v307
        %764 = vst.msk [vmem:[%s280] sm:$0xff] %vm308, %v756
        %765 = vst.msk [vmem:[%s280 + $0x8] sm:$0xff] %vm308, %v757
        %766 = vst.msk [vmem:[%s280 + $0x10] sm:$0xff] %vm308, %v758
        %767 = vst.msk [vmem:[%s280 + $0x18] sm:$0xff] %vm308, %v759
        %768 = vst.msk [vmem:[%s280 + $0x20] sm:$0xff] %vm308, %v760
        %769 = vst.msk [vmem:[%s280 + $0x28] sm:$0xff] %vm308, %v761
        %770 = vst.msk [vmem:[%s280 + $0x30] sm:$0xff] %vm308, %v762
        %771 = vst.msk [vmem:[%s280 + $0x38] sm:$0xff] %vm308, %v763
        %s772 = sand.u32 %s178, 1
        %s773 = sand.u32 %s178, 1
        %s774 = smul.addr %s773, 64
        %s775 = scalar_lea.vmem [#allocation2], %s774
        // Predicated region
        $region49: #{tpu_custom_call.1} parent=47 // pred_check
          %p776 = pneg %p188
        $region50: #{tpu_custom_call.1} parent=47 // pred_check_branch
          %778 = sbr.rel (%p776) target = $region52
        $region51: #{tpu_custom_call.1} parent=47 // pred_region
          %s779 = smul.u32 8, %s18
          %s780 = ssub.s32 15, %s779
          %p781 = scmp.lt.s32.totalorder %s780, 8
          %s782 = scalar_select %p781, %s780, 8
          %s783 = smul.u32 128, %s782
          %p784 = scmp.ne.s32.totalorder 0, %s783
          %s785 = smul.addr %s779, 8
          %s786 = scalar_lea.vmem %s7, %s785
          // Predicated region
          $region53: #{tpu_custom_call.1} parent=51 // pred_check
            %p787 = pneg %p784
          $region54: #{tpu_custom_call.1} parent=51 // pred_check_branch
            %789 = sbr.rel (%p787) target = $region56
          $region55: #{tpu_custom_call.1} parent=51 // pred_region
            // Predicated region
            $region57: #{tpu_custom_call.1} parent=55 // pred_check
              _
            $region58: #{tpu_custom_call.1} parent=55 // pred_check_branch
              %791 = sbr.rel (0) target = $region60
            $region59: #{tpu_custom_call.1} parent=55 // pred_region
              // Predicated region
              $region79: #{tpu_custom_call.1} parent=59 // pred_check
                _
              $region80: #{tpu_custom_call.1} parent=59 // pred_check_branch
                %854 = sbr.rel (0) target = $region82
              $region81: #{tpu_custom_call.1} parent=59 // pred_region
                %s855 = sshrl.u32 %s782, 3
                // While loop
                $region83: #{tpu_custom_call.1} parent=81 // loop_pre_header
                  _
                $region84: #{tpu_custom_call.1} parent=81 // loop_header
                  %s857 = sphi 0, %s859
                  %p858 = scmp.ge.s32.totalorder %s857, %s855
                  %s862 = sphi 0, %s883
                  %s863 = sphi %s775, %s886
                  %s864 = sphi %s786, %s887
                $region85: #{tpu_custom_call.1} parent=81 // loop_header_branch
                  %861 = sbr.rel (%p858) target = $region89
                $region86: #{tpu_custom_call.1} parent=81 // loop_body
                  %v865 = vld [vmem:[%s863] sm:$0xff]
                  %866 = vst [vmem:[%s864] sm:$0xff] %v865
                  %v867 = vld [vmem:[%s863 + $0x8] sm:$0xff]
                  %868 = vst [vmem:[%s864 + $0x8] sm:$0xff] %v867
                  %v869 = vld [vmem:[%s863 + $0x10] sm:$0xff]
                  %870 = vst [vmem:[%s864 + $0x10] sm:$0xff] %v869
                  %v871 = vld [vmem:[%s863 + $0x18] sm:$0xff]
                  %872 = vst [vmem:[%s864 + $0x18] sm:$0xff] %v871
                  %v873 = vld [vmem:[%s863 + $0x20] sm:$0xff]
                  %874 = vst [vmem:[%s864 + $0x20] sm:$0xff] %v873
                  %v875 = vld [vmem:[%s863 + $0x28] sm:$0xff]
                  %876 = vst [vmem:[%s864 + $0x28] sm:$0xff] %v875
                  %v877 = vld [vmem:[%s863 + $0x30] sm:$0xff]
                  %878 = vst [vmem:[%s864 + $0x30] sm:$0xff] %v877
                  %v879 = vld [vmem:[%s863 + $0x38] sm:$0xff]
                  %880 = vst [vmem:[%s864 + $0x38] sm:$0xff] %v879
                  %s881 = sadd.s32 1, %s862
                  %p882 = scmp.ge.s32.totalorder %s881, %s855
                  %s883 = scalar_select %p882, 0, %s881
                  %s884 = smul.u32 %s883, 64
                  %s885 = smul.u32 %s883, 64
                  %s886 = scalar_lea.vmem %s775, %s884 [#allocation2]
                  %s887 = scalar_lea.vmem %s786, %s885
                $region87: #{tpu_custom_call.1} parent=81 // loop_footer
                  %s859 = sadd.s32 %s857, 1
                $region88: #{tpu_custom_call.1} parent=81 // loop_footer_branch
                  %856 = sbr.rel target = $region84
                $region89: #{tpu_custom_call.1} parent=81 // loop_exit
                  _
                %s888 = sshrl.u32 %s782, 3
                %s889 = sand.u32 %s782, 7
                %s890 = smul.u32 %s888, 8
                %s891 = smul.u32 8, %s890
                %s892 = scalar_lea.vmem %s775, %s891 [#allocation2]
                %s893 = smul.u32 8, %s890
                %s894 = scalar_lea.vmem %s786, %s893
                // While loop
                $region90: #{tpu_custom_call.1} parent=81 // loop_pre_header
                  _
                $region91: #{tpu_custom_call.1} parent=81 // loop_header
                  %s896 = sphi 0, %s898
                  %p897 = scmp.ge.s32.totalorder %s896, %s889
                  %s901 = sphi 0, %s908
                  %s902 = sphi %s892, %s911
                  %s903 = sphi %s894, %s912
                $region92: #{tpu_custom_call.1} parent=81 // loop_header_branch
                  %900 = sbr.rel (%p897) target = $region96
                $region93: #{tpu_custom_call.1} parent=81 // loop_body
                  %v904 = vld [vmem:[%s902] sm:$0xff]
                  %905 = vst [vmem:[%s903] sm:$0xff] %v904
                  %s906 = sadd.s32 1, %s901
                  %p907 = scmp.ge.s32.totalorder %s906, %s889
                  %s908 = scalar_select %p907, 0, %s906
                  %s909 = smul.u32 %s908, 8
                  %s910 = smul.u32 %s908, 8
                  %s911 = scalar_lea.vmem %s892, %s909 [#allocation2]
                  %s912 = scalar_lea.vmem %s894, %s910
                $region94: #{tpu_custom_call.1} parent=81 // loop_footer
                  %s898 = sadd.s32 %s896, 1
                $region95: #{tpu_custom_call.1} parent=81 // loop_footer_branch
                  %895 = sbr.rel target = $region91
                $region96: #{tpu_custom_call.1} parent=81 // loop_exit
                  _
              $region82: #{tpu_custom_call.1} parent=59 // pred_fallthru
                _
              // Predicated region
              $region97: #{tpu_custom_call.1} parent=59 // pred_check
                _
              $region98: #{tpu_custom_call.1} parent=59 // pred_check_branch
                %914 = sbr.rel target = $region100
              $region99: #{tpu_custom_call.1} parent=59 // pred_region
                _
              $region100: #{tpu_custom_call.1} parent=59 // pred_fallthru
                _
            $region60: #{tpu_custom_call.1} parent=55 // pred_fallthru
              _
            // Predicated region
            $region61: #{tpu_custom_call.1} parent=55 // pred_check
              _
            $region62: #{tpu_custom_call.1} parent=55 // pred_check_branch
              %793 = sbr.rel target = $region64
            $region63: #{tpu_custom_call.1} parent=55 // pred_region
              %s795 = sshrl.u32 %s782, 3
              // While loop
              $region65: #{tpu_custom_call.1} parent=63 // loop_pre_header
                _
              $region66: #{tpu_custom_call.1} parent=63 // loop_header
                %s797 = sphi 0, %s799
                %p798 = scmp.ge.s32.totalorder %s797, %s795
                %s802 = sphi 0, %s823
                %s803 = sphi %s775, %s826
                %s804 = sphi %s786, %s827
              $region67: #{tpu_custom_call.1} parent=63 // loop_header_branch
                %801 = sbr.rel (%p798) target = $region71
              $region68: #{tpu_custom_call.1} parent=63 // loop_body
                %v805 = vld [vmem:[%s803] sm:$0xff]
                %806 = vst [vmem:[%s804] sm:$0xff] %v805
                %v807 = vld [vmem:[%s803 + $0x8] sm:$0xff]
                %808 = vst [vmem:[%s804 + $0x8] sm:$0xff] %v807
                %v809 = vld [vmem:[%s803 + $0x10] sm:$0xff]
                %810 = vst [vmem:[%s804 + $0x10] sm:$0xff] %v809
                %v811 = vld [vmem:[%s803 + $0x18] sm:$0xff]
                %812 = vst [vmem:[%s804 + $0x18] sm:$0xff] %v811
                %v813 = vld [vmem:[%s803 + $0x20] sm:$0xff]
                %814 = vst [vmem:[%s804 + $0x20] sm:$0xff] %v813
                %v815 = vld [vmem:[%s803 + $0x28] sm:$0xff]
                %816 = vst [vmem:[%s804 + $0x28] sm:$0xff] %v815
                %v817 = vld [vmem:[%s803 + $0x30] sm:$0xff]
                %818 = vst [vmem:[%s804 + $0x30] sm:$0xff] %v817
                %v819 = vld [vmem:[%s803 + $0x38] sm:$0xff]
                %820 = vst [vmem:[%s804 + $0x38] sm:$0xff] %v819
                %s821 = sadd.s32 1, %s802
                %p822 = scmp.ge.s32.totalorder %s821, %s795
                %s823 = scalar_select %p822, 0, %s821
                %s824 = smul.u32 %s823, 64
                %s825 = smul.u32 %s823, 64
                %s826 = scalar_lea.vmem %s775, %s824 [#allocation2]
                %s827 = scalar_lea.vmem %s786, %s825
              $region69: #{tpu_custom_call.1} parent=63 // loop_footer
                %s799 = sadd.s32 %s797, 1
              $region70: #{tpu_custom_call.1} parent=63 // loop_footer_branch
                %796 = sbr.rel target = $region66
              $region71: #{tpu_custom_call.1} parent=63 // loop_exit
                _
              %s828 = sshrl.u32 %s782, 3
              %s829 = sand.u32 %s782, 7
              %s830 = smul.u32 %s828, 8
              %s831 = smul.u32 8, %s830
              %s832 = scalar_lea.vmem %s775, %s831 [#allocation2]
              %s833 = smul.u32 8, %s830
              %s834 = scalar_lea.vmem %s786, %s833
              // While loop
              $region72: #{tpu_custom_call.1} parent=63 // loop_pre_header
                _
              $region73: #{tpu_custom_call.1} parent=63 // loop_header
                %s836 = sphi 0, %s838
                %p837 = scmp.ge.s32.totalorder %s836, %s829
                %s841 = sphi 0, %s848
                %s842 = sphi %s832, %s851
                %s843 = sphi %s834, %s852
              $region74: #{tpu_custom_call.1} parent=63 // loop_header_branch
                %840 = sbr.rel (%p837) target = $region78
              $region75: #{tpu_custom_call.1} parent=63 // loop_body
                %v844 = vld [vmem:[%s842] sm:$0xff]
                %845 = vst [vmem:[%s843] sm:$0xff] %v844
                %s846 = sadd.s32 1, %s841
                %p847 = scmp.ge.s32.totalorder %s846, %s829
                %s848 = scalar_select %p847, 0, %s846
                %s849 = smul.u32 %s848, 8
                %s850 = smul.u32 %s848, 8
                %s851 = scalar_lea.vmem %s832, %s849 [#allocation2]
                %s852 = scalar_lea.vmem %s834, %s850
              $region76: #{tpu_custom_call.1} parent=63 // loop_footer
                %s838 = sadd.s32 %s836, 1
              $region77: #{tpu_custom_call.1} parent=63 // loop_footer_branch
                %835 = sbr.rel target = $region73
              $region78: #{tpu_custom_call.1} parent=63 // loop_exit
                _
            $region64: #{tpu_custom_call.1} parent=55 // pred_fallthru
              _
          $region56: #{tpu_custom_call.1} parent=51 // pred_fallthru
            _
          %915 = vnop
        $region52: #{tpu_custom_call.1} parent=47 // pred_fallthru
          _
      $region48: #{tpu_custom_call.1} parent=5 // pred_fallthru
        _
      %p916 = scmp.le.s32.totalorder 2, %s13
      // Predicated region
      $region101: #{tpu_custom_call.1} parent=5 // pred_check
        %p917 = pneg %p916
      $region102: #{tpu_custom_call.1} parent=5 // pred_check_branch
        %919 = sbr.rel (%p917) target = $region104
      $region103: #{tpu_custom_call.1} parent=5 // pred_region
        %s920 = ssub.s32 %s13, 2
        // Predicated region
        $region105: #{tpu_custom_call.1} parent=103 // pred_check
          %p921 = pneg %p194
        $region106: #{tpu_custom_call.1} parent=103 // pred_check_branch
          %923 = sbr.rel (%p921) target = $region108
        $region107: #{tpu_custom_call.1} parent=103 // pred_region
          %s924 = sand.u32 %s179, 1
          %s925 = sand.u32 %s179, 1
          %s926 = smul.addr %s925, 64
          %s927 = scalar_lea.vmem [#allocation2], %s926
        $region108: #{tpu_custom_call.1} parent=103 // pred_fallthru
          _
      $region104: #{tpu_custom_call.1} parent=5 // pred_fallthru
        _
    $region6: #{tpu_custom_call.1} parent=1 // loop_footer
      %s17 = sadd.s32 1, %s13
    $region7: #{tpu_custom_call.1} parent=1 // loop_footer_branch
      %12 = sbr.rel target = $region3
    $region8: #{tpu_custom_call.1} parent=1 // loop_exit
      _

</llo_original>
